<compile_context>
chip_gen: v7x
topology: tpu7x:2x2x1
jax: 0.10.0
libtpu: 0.0.40
codegen_flags: <defaults>
</compile_context>

<pallas_src>
import functools
import math

import jax
import jax.numpy as jnp
from jax import lax
from jax.experimental import pallas as pl
from jax.experimental.pallas import tpu as pltpu


# ----------------------------------------------------------------------------
# Kernels
# ----------------------------------------------------------------------------
def _resident_kernel(feat_ref, lab_all_ref, lab_tile_ref, out_ref, *,
                     inv_temp, n_valid, tile_m, padded, scale_lhs):
    """One tile of anchors vs. the full (VMEM-resident) feature matrix.

    Transposed layout: cosine is (Bp, TM) with the contrast index on sublanes and
    the anchor index on lanes, so per-anchor reductions are (1, TM) lane-dense.
    """
    i = pl.program_id(0)
    row_start = pl.multiple_of(i * tile_m, tile_m)

    f_all = feat_ref[...]                                   # (Bp, Dp)
    f_tile = feat_ref[pl.ds(row_start, tile_m), :]          # (TM, Dp) anchors

    if scale_lhs:
        # f32 storage: fold 1/temp into the small operand before the matmul.
        f_tile = f_tile * inv_temp
        cos = lax.dot_general(f_all, f_tile,
                              dimension_numbers=(((1,), (1,)), ((), ())),
                              preferred_element_type=jnp.float32)
    else:
        # bf16 storage: scale the f32 accumulator instead (better accuracy).
        cos = lax.dot_general(f_all, f_tile,
                              dimension_numbers=(((1,), (1,)), ((), ())),
                              preferred_element_type=jnp.float32) * inv_temp
    # cos[j, r] = <f_j, f_{anchor r}> / temp

    bp = f_all.shape[0]
    other_g = lax.broadcasted_iota(jnp.int32, (bp, tile_m), 0)            # contrast
    anchor_g = row_start + lax.broadcasted_iota(jnp.int32, (bp, tile_m), 1)
    logits_mask = other_g != anchor_g
    if padded:
        logits_mask = logits_mask & (other_g < n_valid)
    pos_mask = (lab_all_ref[...] == lab_tile_ref[...]) & logits_mask

    neg_inf = jnp.float32(-jnp.inf)
    masked = jnp.where(logits_mask, cos, neg_inf)
    m = jnp.max(masked, axis=0, keepdims=True)                            # (1, TM)
    denom = jnp.sum(jnp.exp(masked - m), axis=0, keepdims=True)           # exp(-inf)=0
    log_denom = m + jnp.log(denom)

    sum_pos = jnp.sum(jnp.where(pos_mask, cos, 0.0), axis=0, keepdims=True)
    cnt = jnp.sum(pos_mask.astype(jnp.float32), axis=0, keepdims=True)

    num = sum_pos - cnt * log_denom                                       # (1, TM)
    out_ref[...] = num * pl.reciprocal(cnt + 1e-5, approx=False)


def _streamed_kernel(feat_col_ref, feat_row_ref, lab_col_ref, lab_row_ref, out_ref,
                     m_acc, d_acc, s_acc, c_acc, *,
                     inv_temp, n_valid, tile_m, tile_n, padded, scale_lhs):
    """Column-streamed online log-sum-exp path for large B (bounded VMEM)."""
    i = pl.program_id(0)                       # anchor (row) tile -> parallel
    j = pl.program_id(1)                       # contrast (column) tile -> reduction
    row_start = pl.multiple_of(i * tile_m, tile_m)
    col_start = pl.multiple_of(j * tile_n, tile_n)

    @pl.when(j == 0)
    def _():
        m_acc[...] = jnp.full_like(m_acc, -jnp.inf)
        d_acc[...] = jnp.zeros_like(d_acc)
        s_acc[...] = jnp.zeros_like(s_acc)
        c_acc[...] = jnp.zeros_like(c_acc)

    f_col = feat_col_ref[...]                  # (TN, Dp) contrast block
    f_row = feat_row_ref[...]                  # (TM, Dp) anchor block
    if scale_lhs:
        cos = lax.dot_general(f_col, f_row * inv_temp,
                              dimension_numbers=(((1,), (1,)), ((), ())),
                              preferred_element_type=jnp.float32)
    else:
        cos = lax.dot_general(f_col, f_row,
                              dimension_numbers=(((1,), (1,)), ((), ())),
                              preferred_element_type=jnp.float32) * inv_temp
    # cos: (TN, TM), contrast index on sublanes, anchor index on lanes.

    other_g = col_start + lax.broadcasted_iota(jnp.int32, (tile_n, tile_m), 0)
    anchor_g = row_start + lax.broadcasted_iota(jnp.int32, (tile_n, tile_m), 1)
    logits_mask = other_g != anchor_g
    if padded:
        logits_mask = logits_mask & (other_g < n_valid)
    pos_mask = (lab_col_ref[...] == lab_row_ref[...]) & logits_mask

    neg_inf = jnp.float32(-jnp.inf)
    masked = jnp.where(logits_mask, cos, neg_inf)
    m_blk = jnp.max(masked, axis=0, keepdims=True)                        # (1, TM)
    m_old = m_acc[...]
    m_new = jnp.maximum(m_old, m_blk)
    alpha = jnp.where(m_old == neg_inf, 0.0, jnp.exp(m_old - m_new))
    d_acc[...] = alpha * d_acc[...] + jnp.sum(jnp.exp(masked - m_new),
                                              axis=0, keepdims=True)
    s_acc[...] = s_acc[...] + jnp.sum(jnp.where(pos_mask, cos, 0.0),
                                      axis=0, keepdims=True)
    c_acc[...] = c_acc[...] + jnp.sum(pos_mask.astype(jnp.float32),
                                      axis=0, keepdims=True)
    m_acc[...] = m_new

    @pl.when(j == pl.num_programs(1) - 1)
    def _():
        log_denom = m_acc[...] + jnp.log(d_acc[...])
        cnt = c_acc[...]
        num = s_acc[...] - cnt * log_denom
        out_ref[...] = num * pl.reciprocal(cnt + 1e-5, approx=False)


# ----------------------------------------------------------------------------
# Wrapper
# ----------------------------------------------------------------------------
def _round_up(x, m):
    return ((x + m - 1) // m) * m


def _norm_tile(t, bp0):
    """None means 'one full tile'; otherwise force a multiple of 128 so every
    BlockSpec last-dim stays lane-legal."""
    if t >= bp0:
        return None
    return max(128, _round_up(int(t), 128))


def _vmem_capacity():
    try:
        info = pltpu.get_tpu_info()
        return int(getattr(info, "vmem_capacity_bytes", 64 * 1024 * 1024))
    except Exception:
        return 64 * 1024 * 1024


def contrastive_loss(features, labels, temp=0.7, use_bf16=None,
                     force_streamed=False, tile_m=None, tile_n=None):
    features = jnp.asarray(features, jnp.float32)
    labels = jnp.asarray(labels, jnp.int32).reshape(-1)
    B, D = features.shape
    LANE, SUB = 128, 8

    Dp = _round_up(D, LANE)
    Bp0 = _round_up(B, SUB)

    if use_bf16 is None:
        # bf16 MXU operands (~3x matmul throughput); keep f32 for small problems
        # where strict parity with the f32 reference matters.
        use_bf16 = (B * D) >= (512 * 512)
    feat_dtype = jnp.bfloat16 if use_bf16 else jnp.float32
    itemsize = jnp.dtype(feat_dtype).itemsize
    scale_lhs = not use_bf16
    inv_temp = float(1.0 / temp)

    vmem_cap = _vmem_capacity()

    tm = _norm_tile(256 if tile_m is None else tile_m, Bp0)
    tm_est = Bp0 if tm is None else tm
    bp_est = _round_up(Bp0, tm_est if tm is not None else SUB)
    # Resident plan: single-buffered feature block + ~6 live (Bp, TM) f32 slabs.
    resident_need = (bp_est * Dp * itemsize + 6 * bp_est * tm_est * 4
                     + 2 * bp_est * 4 + (2 << 20))
    use_streamed = bool(force_streamed) or resident_need > int(0.45 * vmem_cap)

    if use_streamed:
        tn = _norm_tile(512 if tile_n is None else tile_n, Bp0)
        align = SUB
        if tm is not None:
            align = math.lcm(align, tm)
        if tn is not None:
            align = math.lcm(align, tn)
        Bp = _round_up(Bp0, align)
        TM = Bp if tm is None else tm
        TN = Bp if tn is None else tn
    else:
        Bp = _round_up(Bp0, SUB if tm is None else tm)
        TM = Bp if tm is None else tm
        TN = None

    n_row = Bp // TM
    padded = Bp != B

    # Zero padding is exact for inner products; padded contrast entries are masked
    # in-kernel, padded anchor rows are dropped below. Padded labels are -1.
    f = jnp.zeros((Bp, Dp), feat_dtype).at[:B, :D].set(features.astype(feat_dtype))
    l = jnp.full((Bp,), -1, jnp.int32).at[:B].set(labels)
    lab_col = l.reshape(Bp, 1)     # contrast labels (sublane axis)
    lab_row = l.reshape(1, Bp)     # anchor labels (lane axis)

    if not use_streamed:
        kernel = functools.partial(
            _resident_kernel, inv_temp=inv_temp, n_valid=B, tile_m=TM,
            padded=padded, scale_lhs=scale_lhs)
        vmem_limit = int(min(vmem_cap, max(32 << 20, int(resident_need * 1.5))))
        cparams = pltpu.CompilerParams(
            dimension_semantics=("parallel",), vmem_limit_bytes=vmem_limit)

        def call(single_buffer):
            if single_buffer:
                def inv_spec(shape):
                    return pl.BlockSpec(shape, lambda i: (0, 0),
                                        pipeline_mode=pl.Buffered(1))
            else:
                def inv_spec(shape):
                    return pl.BlockSpec(shape, lambda i: (0, 0))
            return pl.pallas_call(
                kernel,
                out_shape=jax.ShapeDtypeStruct((n_row, TM), jnp.float32),
                grid=(n_row,),
                in_specs=[
                    inv_spec((Bp, Dp)),                          # resident features
                    inv_spec((Bp, 1)),                           # contrast labels
                    pl.BlockSpec((1, TM), lambda i: (0, i)),     # anchor labels
                ],
                out_specs=pl.BlockSpec((1, TM), lambda i: (i, 0)),
                compiler_params=cparams,
            )(f, lab_col, lab_row)

        try:
            out = call(True)       # single-buffer the grid-invariant blocks
        except Exception:
            out = call(False)      # fallback: default double buffering
    else:
        n_col = Bp // TN
        kernel = functools.partial(
            _streamed_kernel, inv_temp=inv_temp, n_valid=B, tile_m=TM, tile_n=TN,
            padded=padded, scale_lhs=scale_lhs)
        streamed_need = (2 * (TM + TN) * Dp * itemsize + 8 * TM * TN * 4
                         + 2 * (TM + TN) * 4 + (2 << 20))
        vmem_limit = int(min(vmem_cap, max(32 << 20, int(streamed_need * 2))))
        out = pl.pallas_call(
            kernel,
            out_shape=jax.ShapeDtypeStruct((n_row, TM), jnp.float32),
            grid=(n_row, n_col),
            in_specs=[
                pl.BlockSpec((TN, Dp), lambda i, j: (j, 0)),     # contrast block
                pl.BlockSpec((TM, Dp), lambda i, j: (i, 0)),     # anchor block
                pl.BlockSpec((TN, 1), lambda i, j: (j, 0)),      # contrast labels
                pl.BlockSpec((1, TM), lambda i, j: (0, i)),      # anchor labels
            ],
            out_specs=pl.BlockSpec((1, TM), lambda i, j: (i, 0)),
            scratch_shapes=[pltpu.VMEM((1, TM), jnp.float32) for _ in range(4)],
            compiler_params=pltpu.CompilerParams(
                dimension_semantics=("parallel", "arbitrary"),
                vmem_limit_bytes=vmem_limit),
        )(f, f, lab_col, lab_row)

    mean_log_prob_pos = out.reshape(-1)[:B]
    return -jnp.mean(mean_log_prob_pos)


# ----------------------------------------------------------------------------
# Pure-JAX reference (mirrors the PyTorch module)
# ----------------------------------------------------------------------------
def _reference(features, labels, temp=0.7):
    features = features.astype(jnp.float32)
    labels = labels.reshape(-1, 1)
    B = features.shape[0]
    mask = (labels == labels.T).astype(jnp.float32)
    cosine = (features @ features.T) / temp
    logits_mask = 1.0 - jnp.eye(B, dtype=jnp.float32)
    mask = mask * logits_mask
    logits = jnp.exp(cosine) * logits_mask
    e = jnp.log(jnp.exp(cosine))
    log_prob = e - jnp.log(logits.sum(1, keepdims=True))
    mean_log_prob_pos = (mask * log_prob).sum(1) / (mask.sum(1) + 1e-05)
    return -mean_log_prob_pos.mean()


if __name__ == "__main__":
    key = jax.random.PRNGKey(0)
    kf, kl, kf2, kl2, kf3, kl3 = jax.random.split(key, 6)

    # 1) Primary small test: f32 resident path (single row tile).
    B, D = 8, 32
    features = jax.random.normal(kf, (B, D), dtype=jnp.float32)
    labels = jax.random.randint(kl, (B,), 0, 4, dtype=jnp.int32)
    loss = contrastive_loss(features, labels)
    jax.block_until_ready(loss)
    ref = _reference(features, labels)
    assert jnp.allclose(loss, ref, atol=1e-4, rtol=1e-4), (loss, ref)

    # 2) Multi-row-tile resident path and 3) column-streamed online-LSE path.
    B2, D2 = 256, 32
    f2 = jax.random.normal(kf2, (B2, D2), dtype=jnp.float32)
    l2 = jax.random.randint(kl2, (B2,), 0, 8, dtype=jnp.int32)
    ref2 = _reference(f2, l2)
    loss_res = contrastive_loss(f2, l2, tile_m=128)
    loss_str = contrastive_loss(f2, l2, force_streamed=True, tile_m=128, tile_n=128)
    jax.block_until_ready((loss_res, loss_str))
    assert jnp.allclose(loss_res, ref2, atol=1e-3, rtol=1e-4), (loss_res, ref2)
    assert jnp.allclose(loss_str, ref2, atol=1e-3, rtol=1e-4), (loss_str, ref2)

    # 4) bf16 MXU path (looser tolerance; normalized features as is typical).
    B3, D3 = 128, 128
    f3 = jax.random.normal(kf3, (B3, D3), dtype=jnp.float32)
    f3 = f3 / jnp.linalg.norm(f3, axis=1, keepdims=True)
    l3 = jax.random.randint(kl3, (B3,), 0, 8, dtype=jnp.int32)
    loss_bf16 = contrastive_loss(f3, l3, use_bf16=True)
    jax.block_until_ready(loss_bf16)
    ref3 = _reference(f3, l3)
    assert jnp.allclose(loss_bf16, ref3, atol=2e-2, rtol=2e-2), (loss_bf16, ref3)

    print("KERNEL_OK")
</pallas_src>

<mosaic_0001>
module attributes {stable_mosaic.version = 11 : i64} {
  func.func @_resident_kernel(%arg0: i32, %arg1: memref<8x128xf32, #tpu.memory_space<vmem>>, %arg2: memref<8x1xi32, #tpu.memory_space<vmem>>, %arg3: memref<1x8xi32, #tpu.memory_space<vmem>>, %arg4: memref<1x8xf32, #tpu.memory_space<vmem>>) attributes {dimension_semantics = [#tpu.dimension_semantics<parallel>], iteration_bounds = array<i64: 1>, scalar_prefetch = 0 : i64, scratch_operands = 0 : i64, tpu.core_type = #tpu.core_type<tc>, window_params = [{pipeline_mode = #tpu.pipeline_mode<synchronous>, transform_indices = @transform_0, window_bounds = array<i64: 8, 128>}, {pipeline_mode = #tpu.pipeline_mode<synchronous>, transform_indices = @transform_1, window_bounds = array<i64: 8, 1>}, {transform_indices = @transform_2, window_bounds = array<i64: 1, 8>}, {transform_indices = @transform_3, window_bounds = array<i64: 1, 8>}]} {
    %c8_i32 = arith.constant 8 : i32
    %0 = arith.muli %arg0, %c8_i32 : i32
    %1 = tpu.assume_multiple %0, 8 : i32
    %c0 = arith.constant 0 : index
    %c0_0 = arith.constant 0 : index
    %2 = vector.load %arg1[%c0, %c0_0] : memref<8x128xf32, #tpu.memory_space<vmem>>, vector<8x128xf32>
    %3 = arith.index_cast %1 : i32 to index
    %c0_1 = arith.constant 0 : index
    %4 = vector.load %arg1[%3, %c0_1] : memref<8x128xf32, #tpu.memory_space<vmem>>, vector<8x128xf32>
    %cst = arith.constant 1.42857146 : f32
    %5 = vector.broadcast %cst : f32 to vector<8x128xf32>
    %6 = arith.mulf %4, %5 : vector<8x128xf32>
    %cst_2 = arith.constant dense<0.000000e+00> : vector<8x8xf32>
    %7 = tpu.matmul %2, %6, %cst_2 {dimension_numbers = #tpu.dot_dimension_numbers<[1], [1], [0], [0], [0, 0, 1, 0], [], []>} : vector<8x128xf32>, vector<8x128xf32>, vector<8x8xf32> -> vector<8x8xf32>
    %8 = tpu.iota {dimensions = array<i32: 0>} : vector<8x8xi32>
    %9 = tpu.iota {dimensions = array<i32: 1>} : vector<8x8xi32>
    %10 = vector.broadcast %1 : i32 to vector<8x8xi32>
    %11 = arith.addi %10, %9 : vector<8x8xi32>
    %12 = arith.cmpi ne, %8, %11 : vector<8x8xi32>
    %c0_3 = arith.constant 0 : index
    %c0_4 = arith.constant 0 : index
    %13 = vector.load %arg2[%c0_3, %c0_4] : memref<8x1xi32, #tpu.memory_space<vmem>>, vector<8x1xi32>
    %c0_5 = arith.constant 0 : index
    %c0_6 = arith.constant 0 : index
    %14 = vector.load %arg3[%c0_5, %c0_6] : memref<1x8xi32, #tpu.memory_space<vmem>>, vector<1x8xi32>
    %15 = vector.broadcast %13 : vector<8x1xi32> to vector<8x8xi32>
    %16 = vector.broadcast %14 : vector<1x8xi32> to vector<8x8xi32>
    %17 = arith.cmpi eq, %15, %16 : vector<8x8xi32>
    %18 = arith.andi %17, %12 : vector<8x8xi1>
    %cst_7 = arith.constant 0xFF800000 : f32
    %19 = vector.broadcast %cst_7 : f32 to vector<8x8xf32>
    %20 = arith.select %12, %7, %19 : vector<8x8xi1>, vector<8x8xf32>
    %cst_8 = arith.constant dense<0xFF800000> : vector<8xf32>
    %21 = vector.multi_reduction <maximumf>, %20, %cst_8 [0] : vector<8x8xf32> to vector<8xf32>
    %22 = vector.shape_cast %21 : vector<8xf32> to vector<1x8xf32>
    %23 = vector.broadcast %22 : vector<1x8xf32> to vector<8x8xf32>
    %24 = arith.subf %20, %23 : vector<8x8xf32>
    %25 = math.exp %24 : vector<8x8xf32>
    %cst_9 = arith.constant dense<0.000000e+00> : vector<8xf32>
    %26 = vector.multi_reduction <add>, %25, %cst_9 [0] : vector<8x8xf32> to vector<8xf32>
    %27 = vector.shape_cast %26 : vector<8xf32> to vector<1x8xf32>
    %28 = math.log %27 : vector<1x8xf32>
    %29 = arith.addf %22, %28 : vector<1x8xf32>
    %cst_10 = arith.constant 0.000000e+00 : f32
    %30 = vector.broadcast %cst_10 : f32 to vector<8x8xf32>
    %31 = arith.select %18, %7, %30 : vector<8x8xi1>, vector<8x8xf32>
    %cst_11 = arith.constant dense<0.000000e+00> : vector<8xf32>
    %32 = vector.multi_reduction <add>, %31, %cst_11 [0] : vector<8x8xf32> to vector<8xf32>
    %33 = vector.shape_cast %32 : vector<8xf32> to vector<1x8xf32>
    %34 = arith.extui %18 : vector<8x8xi1> to vector<8x8xi32>
    %35 = arith.sitofp %34 : vector<8x8xi32> to vector<8x8xf32>
    %cst_12 = arith.constant dense<0.000000e+00> : vector<8xf32>
    %36 = vector.multi_reduction <add>, %35, %cst_12 [0] : vector<8x8xf32> to vector<8xf32>
    %37 = vector.shape_cast %36 : vector<8xf32> to vector<1x8xf32>
    %38 = arith.mulf %37, %29 : vector<1x8xf32>
    %39 = arith.subf %33, %38 : vector<1x8xf32>
    %cst_13 = arith.constant 9.99999974E-6 : f32
    %40 = vector.broadcast %cst_13 : f32 to vector<1x8xf32>
    %41 = arith.addf %37, %40 : vector<1x8xf32>
    %42 = tpu.reciprocal %41 : vector<1x8xf32> -> vector<1x8xf32>
    %43 = arith.mulf %39, %42 : vector<1x8xf32>
    %c0_14 = arith.constant 0 : index
    %c0_15 = arith.constant 0 : index
    %44 = vector.load %arg4[%c0_14, %c0_15] : memref<1x8xf32, #tpu.memory_space<vmem>>, vector<1x8xf32>
    tpu.vector_store %arg4[%c0_14, %c0_15], %43 {strides = array<i32>} : memref<1x8xf32, #tpu.memory_space<vmem>>, vector<1x8xf32>,
    return
  }
  func.func @transform_0(%arg0: i32) -> (i32, i32) {
    %c0_i32 = arith.constant 0 : i32
    %c0_i32_0 = arith.constant 0 : i32
    %c0_i32_1 = arith.constant 0 : i32
    return %c0_i32, %c0_i32_0 : i32, i32
  }
  func.func @transform_1(%arg0: i32) -> (i32, i32) {
    %c0_i32 = arith.constant 0 : i32
    %c0_i32_0 = arith.constant 0 : i32
    %c0_i32_1 = arith.constant 0 : i32
    return %c0_i32, %c0_i32_0 : i32, i32
  }
  func.func @transform_2(%arg0: i32) -> (i32, i32) {
    %c0_i32 = arith.constant 0 : i32
    %c0_i32_0 = arith.constant 0 : i32
    return %c0_i32, %arg0 : i32, i32
  }
  func.func @transform_3(%arg0: i32) -> (i32, i32) {
    %c0_i32 = arith.constant 0 : i32
    %c0_i32_0 = arith.constant 0 : i32
    return %arg0, %c0_i32 : i32, i32
  }
}

module attributes {stable_mosaic.version = 11 : i64} {
  func.func @_resident_kernel(%arg0: i32, %arg1: memref<8x128xf32, #tpu.memory_space<vmem>>, %arg2: memref<8x1xi32, #tpu.memory_space<vmem>>, %arg3: memref<1x8xi32, #tpu.memory_space<vmem>>, %arg4: memref<1x8xf32, #tpu.memory_space<vmem>>) attributes {dimension_semantics = [#tpu.dimension_semantics<parallel>], iteration_bounds = array<i64: 1>, scalar_prefetch = 0 : i64, scratch_operands = 0 : i64, tpu.core_type = #tpu.core_type<tc>, window_params = [{pipeline_mode = #tpu.pipeline_mode<synchronous>, transform_indices = @transform_0, window_bounds = array<i64: 8, 128>}, {pipeline_mode = #tpu.pipeline_mode<synchronous>, transform_indices = @transform_1, window_bounds = array<i64: 8, 1>}, {transform_indices = @transform_2, window_bounds = array<i64: 1, 8>}, {transform_indices = @transform_3, window_bounds = array<i64: 1, 8>}]} {
    %c8_i32 = arith.constant 8 : i32
    %0 = arith.muli %arg0, %c8_i32 : i32
    %1 = tpu.assume_multiple %0, 8 : i32
    %c0 = arith.constant 0 : index
    %c0_0 = arith.constant 0 : index
    %2 = vector.load %arg1[%c0, %c0_0] : memref<8x128xf32, #tpu.memory_space<vmem>>, vector<8x128xf32>
    %3 = arith.index_cast %1 : i32 to index
    %c0_1 = arith.constant 0 : index
    %4 = vector.load %arg1[%3, %c0_1] : memref<8x128xf32, #tpu.memory_space<vmem>>, vector<8x128xf32>
    %cst = arith.constant 1.42857146 : f32
    %5 = vector.broadcast %cst : f32 to vector<8x128xf32>
    %6 = arith.mulf %4, %5 : vector<8x128xf32>
    %cst_2 = arith.constant dense<0.000000e+00> : vector<8x8xf32>
    %7 = tpu.matmul %2, %6, %cst_2 {dimension_numbers = #tpu.dot_dimension_numbers<[1], [1], [0], [0], [0, 0, 1, 0], [], []>} : vector<8x128xf32>, vector<8x128xf32>, vector<8x8xf32> -> vector<8x8xf32>
    %8 = tpu.iota {dimensions = array<i32: 0>} : vector<8x8xi32>
    %9 = tpu.iota {dimensions = array<i32: 1>} : vector<8x8xi32>
    %10 = vector.broadcast %1 : i32 to vector<8x8xi32>
    %11 = arith.addi %10, %9 : vector<8x8xi32>
    %12 = arith.cmpi ne, %8, %11 : vector<8x8xi32>
    %c0_3 = arith.constant 0 : index
    %c0_4 = arith.constant 0 : index
    %13 = vector.load %arg2[%c0_3, %c0_4] : memref<8x1xi32, #tpu.memory_space<vmem>>, vector<8x1xi32>
    %c0_5 = arith.constant 0 : index
    %c0_6 = arith.constant 0 : index
    %14 = vector.load %arg3[%c0_5, %c0_6] : memref<1x8xi32, #tpu.memory_space<vmem>>, vector<1x8xi32>
    %15 = vector.broadcast %13 : vector<8x1xi32> to vector<8x8xi32>
    %16 = vector.broadcast %14 : vector<1x8xi32> to vector<8x8xi32>
    %17 = arith.cmpi eq, %15, %16 : vector<8x8xi32>
    %18 = arith.andi %17, %12 : vector<8x8xi1>
    %cst_7 = arith.constant 0xFF800000 : f32
    %19 = vector.broadcast %cst_7 : f32 to vector<8x8xf32>
    %20 = arith.select %12, %7, %19 : vector<8x8xi1>, vector<8x8xf32>
    %cst_8 = arith.constant dense<0xFF800000> : vector<8xf32>
    %21 = vector.multi_reduction <maximumf>, %20, %cst_8 [0] : vector<8x8xf32> to vector<8xf32>
    %22 = vector.shape_cast %21 : vector<8xf32> to vector<1x8xf32>
    %23 = vector.broadcast %22 : vector<1x8xf32> to vector<8x8xf32>
    %24 = arith.subf %20, %23 : vector<8x8xf32>
    %25 = math.exp %24 : vector<8x8xf32>
    %cst_9 = arith.constant dense<0.000000e+00> : vector<8xf32>
    %26 = vector.multi_reduction <add>, %25, %cst_9 [0] : vector<8x8xf32> to vector<8xf32>
    %27 = vector.shape_cast %26 : vector<8xf32> to vector<1x8xf32>
    %28 = math.log %27 : vector<1x8xf32>
    %29 = arith.addf %22, %28 : vector<1x8xf32>
    %cst_10 = arith.constant 0.000000e+00 : f32
    %30 = vector.broadcast %cst_10 : f32 to vector<8x8xf32>
    %31 = arith.select %18, %7, %30 : vector<8x8xi1>, vector<8x8xf32>
    %cst_11 = arith.constant dense<0.000000e+00> : vector<8xf32>
    %32 = vector.multi_reduction <add>, %31, %cst_11 [0] : vector<8x8xf32> to vector<8xf32>
    %33 = vector.shape_cast %32 : vector<8xf32> to vector<1x8xf32>
    %34 = arith.extui %18 : vector<8x8xi1> to vector<8x8xi32>
    %35 = arith.sitofp %34 : vector<8x8xi32> to vector<8x8xf32>
    %cst_12 = arith.constant dense<0.000000e+00> : vector<8xf32>
    %36 = vector.multi_reduction <add>, %35, %cst_12 [0] : vector<8x8xf32> to vector<8xf32>
    %37 = vector.shape_cast %36 : vector<8xf32> to vector<1x8xf32>
    %38 = arith.mulf %37, %29 : vector<1x8xf32>
    %39 = arith.subf %33, %38 : vector<1x8xf32>
    %cst_13 = arith.constant 9.99999974E-6 : f32
    %40 = vector.broadcast %cst_13 : f32 to vector<1x8xf32>
    %41 = arith.addf %37, %40 : vector<1x8xf32>
    %42 = tpu.reciprocal %41 : vector<1x8xf32> -> vector<1x8xf32>
    %43 = arith.mulf %39, %42 : vector<1x8xf32>
    %c0_14 = arith.constant 0 : index
    %c0_15 = arith.constant 0 : index
    %44 = vector.load %arg4[%c0_14, %c0_15] : memref<1x8xf32, #tpu.memory_space<vmem>>, vector<1x8xf32>
    tpu.vector_store %arg4[%c0_14, %c0_15], %43 {strides = array<i32>} : memref<1x8xf32, #tpu.memory_space<vmem>>, vector<1x8xf32>,
    return
  }
  func.func @transform_0(%arg0: i32) -> (i32, i32) {
    %c0_i32 = arith.constant 0 : i32
    %c0_i32_0 = arith.constant 0 : i32
    %c0_i32_1 = arith.constant 0 : i32
    return %c0_i32, %c0_i32_0 : i32, i32
  }
  func.func @transform_1(%arg0: i32) -> (i32, i32) {
    %c0_i32 = arith.constant 0 : i32
    %c0_i32_0 = arith.constant 0 : i32
    %c0_i32_1 = arith.constant 0 : i32
    return %c0_i32, %c0_i32_0 : i32, i32
  }
  func.func @transform_2(%arg0: i32) -> (i32, i32) {
    %c0_i32 = arith.constant 0 : i32
    %c0_i32_0 = arith.constant 0 : i32
    return %c0_i32, %arg0 : i32, i32
  }
  func.func @transform_3(%arg0: i32) -> (i32, i32) {
    %c0_i32 = arith.constant 0 : i32
    %c0_i32_0 = arith.constant 0 : i32
    return %arg0, %c0_i32 : i32, i32
  }
}

</mosaic_0001>

<llo_original>
// kernel: tpu_custom_call.1
$region0: #{tpu_custom_call.1}
  #allocation0 [shape = 'u32[]', space=smem, size = 0x4, offset = 0x4, fixed_abs, tag = 'smem constant byte address 0x4 - core index']
  #allocation1 [shape = 'u32[144,128]{1,0:T(1,128)}', space=vmem, size = 0x12000, scoped, tag = 'internal scratch']
  %s0 = inlined_call_operand.vmem [shape: f32[8,128], index: 0, kind: input, shape index: {}]
  %s1 = inlined_call_operand.vmem [shape: s32[8,1], index: 1, kind: input, shape index: {}]
  %s2 = inlined_call_operand.vmem [shape: s32[1,8], index: 2, kind: input, shape index: {}]
  %s3 = inlined_call_operand.hbm [shape: f32[1,8], index: 3, kind: output, shape index: {}]
  %s4 = sld [smem:[#allocation0]]
  $region22: #{tpu_custom_call.1} parent=0
    _
  %s6 = ssub.s32 1, %s4
  %s7 = scalar_select 0, %s6, %s4
  $region1: #{tpu_custom_call.1} parent=0
    #allocation2 [shape = 'u8[512]{0}', space=vmem, size = 0x400, scoped, tag = 'output window, operand 0, single buffered']
    #allocation3 [shape = 's32[1]{0}', space=sflag, size = 0x4, scoped, tag = 'scoped memory for tpu_custom_call.1']
    %8 = vsyncpa [#allocation3], 0
    // Predicated region
    $region2: #{tpu_custom_call.1} parent=1 // pred_check
      _
    $region3: #{tpu_custom_call.1} parent=1 // pred_check_branch
      %10 = sbr.rel (0) target = $region5
    $region4: #{tpu_custom_call.1} parent=1 // pred_region
      _
    $region5: #{tpu_custom_call.1} parent=1 // pred_fallthru
      _
    // Predicated region
    $region6: #{tpu_custom_call.1} parent=1 // pred_check
      _
    $region7: #{tpu_custom_call.1} parent=1 // pred_check_branch
      %12 = sbr.rel (0) target = $region9
    $region8: #{tpu_custom_call.1} parent=1 // pred_region
      _
    $region9: #{tpu_custom_call.1} parent=1 // pred_fallthru
      _
    // Predicated region
    $region10: #{tpu_custom_call.1} parent=1 // pred_check
      _
    $region11: #{tpu_custom_call.1} parent=1 // pred_check_branch
      %14 = sbr.rel (0) target = $region13
    $region12: #{tpu_custom_call.1} parent=1 // pred_region
      _
    $region13: #{tpu_custom_call.1} parent=1 // pred_fallthru
      _
    %s15 = smul.u32 0, 8
    %v16 = vld [vmem:[%s0] sm:$0xff]
    %s17 = scalar_lea.vmem %s0, %s15
    %v18 = vld [vmem:[%s17] sm:$0xff]
    %v19 = vmul.f32 %v18, 1.4285715
    %20 = vmatprep.subr.mxu0 0.0
    %21 = vmatpush1.xpose.msra.mxu0 %v19
    %22 = vmatprep.subr.mxu0 0.0
    %23 = vmatpush1.xpose.msra.mxu0 0.0
    %24 = vmatprep.subr.mxu0 0.0
    %25 = vmatpush1.xpose.msra.mxu0 0.0
    %26 = vmatprep.subr.mxu0 0.0
    %27 = vmatpush1.xpose.msra.mxu0 0.0
    %28 = vmatprep.subr.mxu0 0.0
    %29 = vmatpush1.xpose.msra.mxu0 0.0
    %30 = vmatprep.subr.mxu0 0.0
    %31 = vmatpush1.xpose.msra.mxu0 0.0
    %32 = vmatprep.subr.mxu0 0.0
    %33 = vmatpush1.xpose.msra.mxu0 0.0
    %34 = vmatprep.subr.mxu0 0.0
    %35 = vmatpush1.xpose.msra.mxu0 0.0
    %36 = vmatprep.subr.mxu0 0.0
    %37 = vmatpush1.xpose.msra.mxu0 0.0
    %38 = vmatprep.subr.mxu0 0.0
    %39 = vmatpush1.xpose.msra.mxu0 0.0
    %40 = vmatprep.subr.mxu0 0.0
    %41 = vmatpush1.xpose.msra.mxu0 0.0
    %42 = vmatprep.subr.mxu0 0.0
    %43 = vmatpush1.xpose.msra.mxu0 0.0
    %44 = vmatprep.subr.mxu0 0.0
    %45 = vmatpush1.xpose.msra.mxu0 0.0
    %46 = vmatprep.subr.mxu0 0.0
    %47 = vmatpush1.xpose.msra.mxu0 0.0
    %48 = vmatprep.subr.mxu0 0.0
    %49 = vmatpush1.xpose.msra.mxu0 0.0
    %50 = vmatprep.subr.mxu0 0.0
    %51 = vmatpush1.xpose.msra.mxu0 0.0
    %52 = vmatprep.subr.mxu0 0.0
    %53 = vmatpush1.xpose.msra.mxu0 0.0
    %54 = vmatprep.subr.mxu0 0.0
    %55 = vmatpush1.xpose.msra.mxu0 0.0
    %56 = vmatprep.subr.mxu0 0.0
    %57 = vmatpush1.xpose.msra.mxu0 0.0
    %58 = vmatprep.subr.mxu0 0.0
    %59 = vmatpush1.xpose.msra.mxu0 0.0
    %60 = vmatprep.subr.mxu0 0.0
    %61 = vmatpush1.xpose.msra.mxu0 0.0
    %62 = vmatprep.subr.mxu0 0.0
    %63 = vmatpush1.xpose.msra.mxu0 0.0
    %64 = vmatprep.subr.mxu0 0.0
    %65 = vmatpush1.xpose.msra.mxu0 0.0
    %66 = vmatprep.subr.mxu0 0.0
    %67 = vmatpush1.xpose.msra.mxu0 0.0
    %68 = vmatprep.subr.mxu0 0.0
    %69 = vmatpush1.xpose.msra.mxu0 0.0
    %70 = vmatprep.subr.mxu0 0.0
    %71 = vmatpush1.xpose.msra.mxu0 0.0
    %72 = vmatprep.subr.mxu0 0.0
    %73 = vmatpush1.xpose.msra.mxu0 0.0
    %74 = vmatprep.subr.mxu0 0.0
    %75 = vmatpush1.xpose.msra.mxu0 0.0
    %76 = vmatprep.subr.mxu0 0.0
    %77 = vmatpush1.xpose.msra.mxu0 0.0
    %78 = vmatprep.subr.mxu0 0.0
    %79 = vmatpush1.xpose.msra.mxu0 0.0
    %80 = vmatprep.subr.mxu0 0.0
    %81 = vmatpush1.xpose.msra.mxu0 0.0
    %82 = vmatprep.subr.mxu0 0.0
    %83 = vmatpush1.xpose.msra.mxu0 0.0
    %84 = vmatprep.mubr.f32.mxu0 0.0
    %85 = vmatmul.mubr.f32.gmra.mrb[0].mxu0 %v16
    %v86 = vpop.f32.mrb[0].mxu0
    %v87 = vadd.f32 0.0, %v86
    %v88 = vpop.f32.mrb[0].mxu0
    %89 = vdwg.mxu0
    %v90 = vlaneseq
    %v91 = vshrl.u32 %v90, 7
    %v92 = vlaneseq
    %v93 = vand.u32 %v92, 127
    %v94 = vstv %s15
    %v95 = vadd.s32 %v94, %v93
    %vm96 = vcmp.ne.s32.totalorder %v91, %v95
    %v97 = vld [vmem:[%s1] sm:$0xff]
    %v98 = vld [vmem:[%s2] sm:$0x1]
    %99 = vset.pattern.permute.xlu0 0
    %100 = vperm.xlu0 %99, %v97
    %v101 = vpop.permute.xlu0 %100
    %v102 = vlaneseq
    %v103 = vshrl.u32 %v102, 7
    %v104 = vsub.s32 0, %v103
    %v105 = vrot.slane %v98, %v104
    %vm106 = vcmp.eq.s32.totalorder %v101, %v105
    %vm107 = vmand %vm106, %vm96
    %v108 = vsel %vm96, %v87, -inf
    %vm109 = vcmask 64512
    %v110 = vsel %vm109, %v108, -inf
    %v111 = vrot.slane %v110, 4
    %v112 = vmax.f32 %v110, %v111
    %v113 = vrot.slane %v112, 2
    %v114 = vmax.f32 %v112, %v113
    %v115 = vrot.slane %v114, 1
    %v116 = vmax.f32 %v114, %v115
    %v117 = vsub.f32 %v108, %v116
    %v118 = vmul.f32 %v117, 1.442695
    %v119 = vpow.pop %v118
    %v120 = vsel %vm109, %v119, 0.0
    %v121 = vrot.slane %v120, 4
    %v122 = vadd.f32 %v120, %v121
    %v123 = vrot.slane %v122, 2
    %v124 = vadd.f32 %v122, %v123
    %v125 = vrot.slane %v124, 1
    %v126 = vadd.f32 %v124, %v125
    %v127 = vlog2.pop %v126
    %v128 = vmul.f32 %v127, 0.6931472
    %v129 = vadd.f32 %v116, %v128
    %v130 = vsel %vm107, %v87, 0.0
    %v131 = vsel %vm109, %v130, 0.0
    %v132 = vrot.slane %v131, 4
    %v133 = vadd.f32 %v131, %v132
    %v134 = vrot.slane %v133, 2
    %v135 = vadd.f32 %v133, %v134
    %v136 = vrot.slane %v135, 1
    %v137 = vadd.f32 %v135, %v136
    %v138 = vsel %vm107, 1, 0
    %v139 = vcvt.s32.f32 %v138
    %v140 = vsel %vm109, %v139, 0.0
    %v141 = vrot.slane %v140, 4
    %v142 = vadd.f32 %v140, %v141
    %v143 = vrot.slane %v142, 2
    %v144 = vadd.f32 %v142, %v143
    %v145 = vrot.slane %v144, 1
    %v146 = vadd.f32 %v144, %v145
    %v147 = vmul.f32 %v146, %v129
    %v148 = vsub.f32 %v137, %v147
    %v149 = vadd.f32 %v146, 1e-05
    %v150 = vrcp.pop %v149
    %v151 = vmul.f32 %v148, %v150
    %vm152 = vcmask 57344
    %153 = vst.msk [vmem:[#allocation2] sm:$0x1] %vm152, %v151
    // Predicated region
    $region14: #{tpu_custom_call.1} parent=1 // pred_check
      _
    $region15: #{tpu_custom_call.1} parent=1 // pred_check_branch
      %155 = sbr.rel (0) target = $region17
    $region16: #{tpu_custom_call.1} parent=1 // pred_region
      %s157 = ssub.s32 16, 16
      %158 = vsyncadd [#allocation3], %s157
      %s160 = sshll.u32 [#allocation2], 4
      %s161 = int_to_ptr.vmem [resolvable:$true] %s160
      %163 = dma.vmem_to_hbm [thread:$0]  %s161, 16, %s3, [#allocation3]
    $region17: #{tpu_custom_call.1} parent=1 // pred_fallthru
      _
    // Predicated region
    $region18: #{tpu_custom_call.1} parent=1 // pred_check
      _
    $region19: #{tpu_custom_call.1} parent=1 // pred_check_branch
      %165 = sbr.rel (0) target = $region21
    $region20: #{tpu_custom_call.1} parent=1 // pred_region
      %166 = dma.done [#allocation3], 16
    $region21: #{tpu_custom_call.1} parent=1 // pred_fallthru
      _
    %167 = vsyncpa [#allocation3], 1

// kernel: tpu_custom_call.1
$region0: #{tpu_custom_call.1}
  #allocation0 [shape = 'u32[]', space=smem, size = 0x4, offset = 0x4, fixed_abs, tag = 'smem constant byte address 0x4 - core index']
  #allocation1 [shape = 'u32[144,128]{1,0:T(1,128)}', space=vmem, size = 0x12000, scoped, tag = 'internal scratch']
  %s0 = inlined_call_operand.vmem [shape: f32[8,128], index: 0, kind: input, shape index: {}]
  %s1 = inlined_call_operand.vmem [shape: s32[8,1], index: 1, kind: input, shape index: {}]
  %s2 = inlined_call_operand.vmem [shape: s32[1,8], index: 2, kind: input, shape index: {}]
  %s3 = inlined_call_operand.hbm [shape: f32[1,8], index: 3, kind: output, shape index: {}]
  %s4 = sld [smem:[#allocation0]]
  $region22: #{tpu_custom_call.1} parent=0
    _
  %s6 = ssub.s32 1, %s4
  %s7 = scalar_select 0, %s6, %s4
  $region1: #{tpu_custom_call.1} parent=0
    #allocation2 [shape = 'u8[512]{0}', space=vmem, size = 0x400, scoped, tag = 'output window, operand 0, single buffered']
    #allocation3 [shape = 's32[1]{0}', space=sflag, size = 0x4, scoped, tag = 'scoped memory for tpu_custom_call.1']
    %8 = vsyncpa [#allocation3], 0
    // Predicated region
    $region2: #{tpu_custom_call.1} parent=1 // pred_check
      _
    $region3: #{tpu_custom_call.1} parent=1 // pred_check_branch
      %10 = sbr.rel (0) target = $region5
    $region4: #{tpu_custom_call.1} parent=1 // pred_region
      _
    $region5: #{tpu_custom_call.1} parent=1 // pred_fallthru
      _
    // Predicated region
    $region6: #{tpu_custom_call.1} parent=1 // pred_check
      _
    $region7: #{tpu_custom_call.1} parent=1 // pred_check_branch
      %12 = sbr.rel (0) target = $region9
    $region8: #{tpu_custom_call.1} parent=1 // pred_region
      _
    $region9: #{tpu_custom_call.1} parent=1 // pred_fallthru
      _
    // Predicated region
    $region10: #{tpu_custom_call.1} parent=1 // pred_check
      _
    $region11: #{tpu_custom_call.1} parent=1 // pred_check_branch
      %14 = sbr.rel (0) target = $region13
    $region12: #{tpu_custom_call.1} parent=1 // pred_region
      _
    $region13: #{tpu_custom_call.1} parent=1 // pred_fallthru
      _
    %s15 = smul.u32 0, 8
    %v16 = vld [vmem:[%s0] sm:$0xff]
    %s17 = scalar_lea.vmem %s0, %s15
    %v18 = vld [vmem:[%s17] sm:$0xff]
    %v19 = vmul.f32 %v18, 1.4285715
    %20 = vmatprep.subr.mxu0 0.0
    %21 = vmatpush1.xpose.msra.mxu0 %v19
    %22 = vmatprep.subr.mxu0 0.0
    %23 = vmatpush1.xpose.msra.mxu0 0.0
    %24 = vmatprep.subr.mxu0 0.0
    %25 = vmatpush1.xpose.msra.mxu0 0.0
    %26 = vmatprep.subr.mxu0 0.0
    %27 = vmatpush1.xpose.msra.mxu0 0.0
    %28 = vmatprep.subr.mxu0 0.0
    %29 = vmatpush1.xpose.msra.mxu0 0.0
    %30 = vmatprep.subr.mxu0 0.0
    %31 = vmatpush1.xpose.msra.mxu0 0.0
    %32 = vmatprep.subr.mxu0 0.0
    %33 = vmatpush1.xpose.msra.mxu0 0.0
    %34 = vmatprep.subr.mxu0 0.0
    %35 = vmatpush1.xpose.msra.mxu0 0.0
    %36 = vmatprep.subr.mxu0 0.0
    %37 = vmatpush1.xpose.msra.mxu0 0.0
    %38 = vmatprep.subr.mxu0 0.0
    %39 = vmatpush1.xpose.msra.mxu0 0.0
    %40 = vmatprep.subr.mxu0 0.0
    %41 = vmatpush1.xpose.msra.mxu0 0.0
    %42 = vmatprep.subr.mxu0 0.0
    %43 = vmatpush1.xpose.msra.mxu0 0.0
    %44 = vmatprep.subr.mxu0 0.0
    %45 = vmatpush1.xpose.msra.mxu0 0.0
    %46 = vmatprep.subr.mxu0 0.0
    %47 = vmatpush1.xpose.msra.mxu0 0.0
    %48 = vmatprep.subr.mxu0 0.0
    %49 = vmatpush1.xpose.msra.mxu0 0.0
    %50 = vmatprep.subr.mxu0 0.0
    %51 = vmatpush1.xpose.msra.mxu0 0.0
    %52 = vmatprep.subr.mxu0 0.0
    %53 = vmatpush1.xpose.msra.mxu0 0.0
    %54 = vmatprep.subr.mxu0 0.0
    %55 = vmatpush1.xpose.msra.mxu0 0.0
    %56 = vmatprep.subr.mxu0 0.0
    %57 = vmatpush1.xpose.msra.mxu0 0.0
    %58 = vmatprep.subr.mxu0 0.0
    %59 = vmatpush1.xpose.msra.mxu0 0.0
    %60 = vmatprep.subr.mxu0 0.0
    %61 = vmatpush1.xpose.msra.mxu0 0.0
    %62 = vmatprep.subr.mxu0 0.0
    %63 = vmatpush1.xpose.msra.mxu0 0.0
    %64 = vmatprep.subr.mxu0 0.0
    %65 = vmatpush1.xpose.msra.mxu0 0.0
    %66 = vmatprep.subr.mxu0 0.0
    %67 = vmatpush1.xpose.msra.mxu0 0.0
    %68 = vmatprep.subr.mxu0 0.0
    %69 = vmatpush1.xpose.msra.mxu0 0.0
    %70 = vmatprep.subr.mxu0 0.0
    %71 = vmatpush1.xpose.msra.mxu0 0.0
    %72 = vmatprep.subr.mxu0 0.0
    %73 = vmatpush1.xpose.msra.mxu0 0.0
    %74 = vmatprep.subr.mxu0 0.0
    %75 = vmatpush1.xpose.msra.mxu0 0.0
    %76 = vmatprep.subr.mxu0 0.0
    %77 = vmatpush1.xpose.msra.mxu0 0.0
    %78 = vmatprep.subr.mxu0 0.0
    %79 = vmatpush1.xpose.msra.mxu0 0.0
    %80 = vmatprep.subr.mxu0 0.0
    %81 = vmatpush1.xpose.msra.mxu0 0.0
    %82 = vmatprep.subr.mxu0 0.0
    %83 = vmatpush1.xpose.msra.mxu0 0.0
    %84 = vmatprep.mubr.f32.mxu0 0.0
    %85 = vmatmul.mubr.f32.gmra.mrb[0].mxu0 %v16
    %v86 = vpop.f32.mrb[0].mxu0
    %v87 = vadd.f32 0.0, %v86
    %v88 = vpop.f32.mrb[0].mxu0
    %89 = vdwg.mxu0
    %v90 = vlaneseq
    %v91 = vshrl.u32 %v90, 7
    %v92 = vlaneseq
    %v93 = vand.u32 %v92, 127
    %v94 = vstv %s15
    %v95 = vadd.s32 %v94, %v93
    %vm96 = vcmp.ne.s32.totalorder %v91, %v95
    %v97 = vld [vmem:[%s1] sm:$0xff]
    %v98 = vld [vmem:[%s2] sm:$0x1]
    %99 = vset.pattern.permute.xlu0 0
    %100 = vperm.xlu0 %99, %v97
    %v101 = vpop.permute.xlu0 %100
    %v102 = vlaneseq
    %v103 = vshrl.u32 %v102, 7
    %v104 = vsub.s32 0, %v103
    %v105 = vrot.slane %v98, %v104
    %vm106 = vcmp.eq.s32.totalorder %v101, %v105
    %vm107 = vmand %vm106, %vm96
    %v108 = vsel %vm96, %v87, -inf
    %vm109 = vcmask 64512
    %v110 = vsel %vm109, %v108, -inf
    %v111 = vrot.slane %v110, 4
    %v112 = vmax.f32 %v110, %v111
    %v113 = vrot.slane %v112, 2
    %v114 = vmax.f32 %v112, %v113
    %v115 = vrot.slane %v114, 1
    %v116 = vmax.f32 %v114, %v115
    %v117 = vsub.f32 %v108, %v116
    %v118 = vmul.f32 %v117, 1.442695
    %v119 = vpow.pop %v118
    %v120 = vsel %vm109, %v119, 0.0
    %v121 = vrot.slane %v120, 4
    %v122 = vadd.f32 %v120, %v121
    %v123 = vrot.slane %v122, 2
    %v124 = vadd.f32 %v122, %v123
    %v125 = vrot.slane %v124, 1
    %v126 = vadd.f32 %v124, %v125
    %v127 = vlog2.pop %v126
    %v128 = vmul.f32 %v127, 0.6931472
    %v129 = vadd.f32 %v116, %v128
    %v130 = vsel %vm107, %v87, 0.0
    %v131 = vsel %vm109, %v130, 0.0
    %v132 = vrot.slane %v131, 4
    %v133 = vadd.f32 %v131, %v132
    %v134 = vrot.slane %v133, 2
    %v135 = vadd.f32 %v133, %v134
    %v136 = vrot.slane %v135, 1
    %v137 = vadd.f32 %v135, %v136
    %v138 = vsel %vm107, 1, 0
    %v139 = vcvt.s32.f32 %v138
    %v140 = vsel %vm109, %v139, 0.0
    %v141 = vrot.slane %v140, 4
    %v142 = vadd.f32 %v140, %v141
    %v143 = vrot.slane %v142, 2
    %v144 = vadd.f32 %v142, %v143
    %v145 = vrot.slane %v144, 1
    %v146 = vadd.f32 %v144, %v145
    %v147 = vmul.f32 %v146, %v129
    %v148 = vsub.f32 %v137, %v147
    %v149 = vadd.f32 %v146, 1e-05
    %v150 = vrcp.pop %v149
    %v151 = vmul.f32 %v148, %v150
    %vm152 = vcmask 57344
    %153 = vst.msk [vmem:[#allocation2] sm:$0x1] %vm152, %v151
    // Predicated region
    $region14: #{tpu_custom_call.1} parent=1 // pred_check
      _
    $region15: #{tpu_custom_call.1} parent=1 // pred_check_branch
      %155 = sbr.rel (0) target = $region17
    $region16: #{tpu_custom_call.1} parent=1 // pred_region
      %s157 = ssub.s32 16, 16
      %158 = vsyncadd [#allocation3], %s157
      %s160 = sshll.u32 [#allocation2], 4
      %s161 = int_to_ptr.vmem [resolvable:$true] %s160
      %163 = dma.vmem_to_hbm [thread:$0]  %s161, 16, %s3, [#allocation3]
    $region17: #{tpu_custom_call.1} parent=1 // pred_fallthru
      _
    // Predicated region
    $region18: #{tpu_custom_call.1} parent=1 // pred_check
      _
    $region19: #{tpu_custom_call.1} parent=1 // pred_check_branch
      %165 = sbr.rel (0) target = $region21
    $region20: #{tpu_custom_call.1} parent=1 // pred_region
      %166 = dma.done [#allocation3], 16
    $region21: #{tpu_custom_call.1} parent=1 // pred_fallthru
      _
    %167 = vsyncpa [#allocation3], 1

</llo_original>
